<compile_context>
chip_gen: v6e
topology: v6e:2x2x1
jax: 0.10.0
libtpu: 0.0.40
codegen_flags: <defaults>
</compile_context>

<pallas_src>
import jax
import jax.numpy as jnp
from jax.experimental import pallas as pl
from jax.experimental.pallas import tpu as pltpu

EPS = 1e-5
LANE = 128


# ----------------------------------------------------------------------------
# Architecture layout helpers
# ----------------------------------------------------------------------------
def build_layout(input_dim, hidden_dims, latent_dim):
    """Returns a list of (din, dout, has_bn) per linear layer (enc then dec)."""
    hdims = list(hidden_dims) + [latent_dim]          # e.g. [32, 16, 8]
    enc = [input_dim] + hdims                         # [64, 32, 16, 8]
    dec = hdims[::-1] + [input_dim]                   # [8, 16, 32, 64]
    layers = []
    for i in range(len(enc) - 1):
        layers.append((enc[i], enc[i + 1], i > 0))            # encoder
    for i in range(len(dec) - 1):
        layers.append((dec[i], dec[i + 1], i < len(dec) - 2))  # decoder
    return layers


def vector_rows(layers):
    """Row index inside the vector slab for each layer's (bias, gamma, beta)."""
    rows, r = [], 0
    for (_, _, has_bn) in layers:
        b_row = r
        r += 1
        if has_bn:
            g_row, be_row = r, r + 1
            r += 2
        else:
            g_row = be_row = None
        rows.append((b_row, g_row, be_row))
    n_rows = max(8, -(-r // 8) * 8)   # pad row count to a multiple of 8
    return rows, n_rows


def pack_params(flat_params, layers, rows, n_vec_rows):
    """Pack the flat param list into one weight slab and one vector slab."""
    assert all(max(din, dout) <= LANE for (din, dout, _) in layers)
    w_slab = jnp.zeros((len(layers), LANE, LANE), jnp.float32)
    v_slab = jnp.zeros((n_vec_rows, LANE), jnp.float32)
    it = iter(flat_params)
    for l, (din, dout, has_bn) in enumerate(layers):
        b_row, g_row, be_row = rows[l]
        w = next(it)
        b = next(it)
        w_slab = w_slab.at[l, :din, :dout].set(w)
        v_slab = v_slab.at[b_row, :dout].set(b.reshape(-1))
        if has_bn:
            g = next(it)
            be = next(it)
            v_slab = v_slab.at[g_row, :dout].set(g.reshape(-1))
            v_slab = v_slab.at[be_row, :dout].set(be.reshape(-1))
    return w_slab, v_slab


# ----------------------------------------------------------------------------
# Fused kernel
# ----------------------------------------------------------------------------
def make_autoencoder_kernel(layers, rows, n_valid, b_pad):
    need_mask = (n_valid != b_pad)
    inv_n = 1.0 / float(n_valid)
    last = len(layers) - 1

    def kernel(x_ref, w_ref, v_ref, out_ref):
        v = v_ref[...]                      # (n_vec_rows, 128), loaded once
        if need_mask:
            row_id = jax.lax.broadcasted_iota(jnp.int32, (b_pad, 1), 0)
            valid = row_id < n_valid
        else:
            valid = None

        def bn_fold(h, g_row, be_row):
            # Batch statistics over the real rows only; biased variance.
            hm = jnp.where(valid, h, 0.0) if need_mask else h
            mean = jnp.sum(hm, axis=0, keepdims=True) * inv_n
            c2 = (h - mean) * (h - mean)
            if need_mask:
                c2 = jnp.where(valid, c2, 0.0)
            var = jnp.sum(c2, axis=0, keepdims=True) * inv_n
            scale = v[g_row:g_row + 1, :] * jax.lax.rsqrt(var + EPS)
            shift = v[be_row:be_row + 1, :] - mean * scale
            return h * scale + shift

        h = x_ref[...]                      # (b_pad, 128), lane-dense
        for l, (din, dout, has_bn) in enumerate(layers):
            b_row, g_row, be_row = rows[l]
            h = jnp.dot(h, w_ref[l], preferred_element_type=jnp.float32)
            h = h + v[b_row:b_row + 1, :]
            if l != last:
                h = jnp.maximum(h, 0.0)
            if has_bn:
                h = bn_fold(h, g_row, be_row)
        out_ref[...] = h

    return kernel


def autoencoder_forward(x, flat_params, input_dim, hidden_dims, latent_dim):
    """Fused forward pass. x: (batch, input_dim) f32."""
    n, d_in = x.shape
    assert d_in == input_dim
    layers = build_layout(input_dim, hidden_dims, latent_dim)
    rows, n_vec_rows = vector_rows(layers)

    b_pad = max(8, -(-n // 8) * 8)
    x_pad = jnp.zeros((b_pad, LANE), jnp.float32).at[:n, :input_dim].set(x)
    w_slab, v_slab = pack_params(flat_params, layers, rows, n_vec_rows)

    kernel = make_autoencoder_kernel(layers, rows, n, b_pad)
    vmem_spec = pl.BlockSpec(memory_space=pltpu.MemorySpace.VMEM)

    out = pl.pallas_call(
        kernel,
        out_shape=jax.ShapeDtypeStruct((b_pad, LANE), jnp.float32),
        in_specs=[vmem_spec, vmem_spec, vmem_spec],
        out_specs=vmem_spec,
        compiler_params=pltpu.CompilerParams(
            vmem_limit_bytes=32 * 1024 * 1024),
    )(x_pad, w_slab, v_slab)

    return out[:n, :input_dim]


# ----------------------------------------------------------------------------
# Synthetic parameters + plain-JAX reference (mirrors the PyTorch forward)
# ----------------------------------------------------------------------------
def make_params(key, input_dim, hidden_dims, latent_dim):
    layers = build_layout(input_dim, hidden_dims, latent_dim)
    params = []
    keys = iter(jax.random.split(key, 4 * len(layers)))

    for (din, dout, has_bn) in layers:
        k1, k2 = next(keys), next(keys)
        params.append(0.1 * jax.random.normal(k1, (din, dout), jnp.float32))
        params.append(0.1 * jax.random.normal(k2, (1, dout), jnp.float32))
        if has_bn:
            k3, k4 = next(keys), next(keys)
            params.append(1.0 + 0.05 * jax.random.normal(k3, (1, dout), jnp.float32))
            params.append(0.05 * jax.random.normal(k4, (1, dout), jnp.float32))
    return params


def _bn_train(h, gamma, beta):
    mean = jnp.mean(h, axis=0, keepdims=True)
    var = jnp.mean((h - mean) ** 2, axis=0, keepdims=True)
    return gamma * (h - mean) * jax.lax.rsqrt(var + EPS) + beta


def reference_forward(x, flat_params, input_dim, hidden_dims, latent_dim):
    layers = build_layout(input_dim, hidden_dims, latent_dim)
    it = iter(flat_params)
    h = x
    last = len(layers) - 1
    for l, (din, dout, has_bn) in enumerate(layers):
        w, b = next(it), next(it)
        h = h @ w + b
        if l != last:
            h = jnp.maximum(h, 0.0)
        if has_bn:
            g, be = next(it), next(it)
            h = _bn_train(h, g, be)
    return h


# ----------------------------------------------------------------------------
if __name__ == "__main__":
    input_dim = 64
    hidden_dims = [32, 16]
    latent_dim = 8
    batch = 8

    key = jax.random.PRNGKey(0)
    kx, kp = jax.random.split(key)
    x = jax.random.normal(kx, (batch, input_dim), jnp.float32)
    params = make_params(kp, input_dim, hidden_dims, latent_dim)

    out = autoencoder_forward(x, params, input_dim, hidden_dims, latent_dim)
    out = jax.block_until_ready(out)

    ref = reference_forward(x, params, input_dim, hidden_dims, latent_dim)
    assert out.shape == (batch, input_dim)
    assert jnp.allclose(out, ref, atol=1e-4, rtol=1e-4), "mismatch vs reference"

    print("KERNEL_OK")
</pallas_src>

<mosaic_0001>
module attributes {stable_mosaic.version = 11 : i64} {
  func.func @kernel(%arg0: memref<8x128xf32, #tpu.memory_space<vmem>>, %arg1: memref<6x128x128xf32, #tpu.memory_space<vmem>>, %arg2: memref<16x128xf32, #tpu.memory_space<vmem>>, %arg3: memref<8x128xf32, #tpu.memory_space<vmem>>) attributes {dimension_semantics = [], scalar_prefetch = 0 : i64, scratch_operands = 0 : i64, tpu.core_type = #tpu.core_type<tc>} {
    %c0 = arith.constant 0 : index
    %c0_0 = arith.constant 0 : index
    %0 = vector.load %arg2[%c0, %c0_0] : memref<16x128xf32, #tpu.memory_space<vmem>>, vector<16x128xf32>
    %c0_1 = arith.constant 0 : index
    %c0_2 = arith.constant 0 : index
    %1 = vector.load %arg0[%c0_1, %c0_2] : memref<8x128xf32, #tpu.memory_space<vmem>>, vector<8x128xf32>
    %c0_3 = arith.constant 0 : index
    %c0_4 = arith.constant 0 : index
    %c0_5 = arith.constant 0 : index
    %2 = vector.load %arg1[%c0_3, %c0_4, %c0_5] : memref<6x128x128xf32, #tpu.memory_space<vmem>>, vector<1x128x128xf32>
    %3 = vector.shape_cast %2 : vector<1x128x128xf32> to vector<128x128xf32>
    %cst = arith.constant dense<0.000000e+00> : vector<8x128xf32>
    %4 = tpu.matmul %1, %3, %cst {dimension_numbers = #tpu.dot_dimension_numbers<[1], [0], [0], [1], [0, 0, 1, 1], [], []>} : vector<8x128xf32>, vector<128x128xf32>, vector<8x128xf32> -> vector<8x128xf32>
    %5 = vector.extract_strided_slice %0 {offsets = [0, 0], sizes = [1, 128], strides = [1, 1]} : vector<16x128xf32> to vector<1x128xf32>
    %6 = vector.broadcast %5 : vector<1x128xf32> to vector<8x128xf32>
    %7 = arith.addf %4, %6 : vector<8x128xf32>
    %cst_6 = arith.constant 0.000000e+00 : f32
    %8 = vector.broadcast %cst_6 : f32 to vector<8x128xf32>
    %9 = arith.maximumf %7, %8 : vector<8x128xf32>
    %c1 = arith.constant 1 : index
    %c0_7 = arith.constant 0 : index
    %c0_8 = arith.constant 0 : index
    %10 = vector.load %arg1[%c1, %c0_7, %c0_8] : memref<6x128x128xf32, #tpu.memory_space<vmem>>, vector<1x128x128xf32>
    %11 = vector.shape_cast %10 : vector<1x128x128xf32> to vector<128x128xf32>
    %cst_9 = arith.constant dense<0.000000e+00> : vector<8x128xf32>
    %12 = tpu.matmul %9, %11, %cst_9 {dimension_numbers = #tpu.dot_dimension_numbers<[1], [0], [0], [1], [0, 0, 1, 1], [], []>} : vector<8x128xf32>, vector<128x128xf32>, vector<8x128xf32> -> vector<8x128xf32>
    %13 = vector.extract_strided_slice %0 {offsets = [1, 0], sizes = [1, 128], strides = [1, 1]} : vector<16x128xf32> to vector<1x128xf32>
    %14 = vector.broadcast %13 : vector<1x128xf32> to vector<8x128xf32>
    %15 = arith.addf %12, %14 : vector<8x128xf32>
    %cst_10 = arith.constant 0.000000e+00 : f32
    %16 = vector.broadcast %cst_10 : f32 to vector<8x128xf32>
    %17 = arith.maximumf %15, %16 : vector<8x128xf32>
    %cst_11 = arith.constant dense<0.000000e+00> : vector<128xf32>
    %18 = vector.multi_reduction <add>, %17, %cst_11 [0] : vector<8x128xf32> to vector<128xf32>
    %19 = vector.shape_cast %18 : vector<128xf32> to vector<1x128xf32>
    %cst_12 = arith.constant 1.250000e-01 : f32
    %20 = vector.broadcast %cst_12 : f32 to vector<1x128xf32>
    %21 = arith.mulf %19, %20 : vector<1x128xf32>
    %22 = vector.broadcast %21 : vector<1x128xf32> to vector<8x128xf32>
    %23 = arith.subf %17, %22 : vector<8x128xf32>
    %24 = vector.broadcast %21 : vector<1x128xf32> to vector<8x128xf32>
    %25 = arith.subf %17, %24 : vector<8x128xf32>
    %26 = arith.mulf %23, %25 : vector<8x128xf32>
    %cst_13 = arith.constant dense<0.000000e+00> : vector<128xf32>
    %27 = vector.multi_reduction <add>, %26, %cst_13 [0] : vector<8x128xf32> to vector<128xf32>
    %28 = vector.shape_cast %27 : vector<128xf32> to vector<1x128xf32>
    %cst_14 = arith.constant 1.250000e-01 : f32
    %29 = vector.broadcast %cst_14 : f32 to vector<1x128xf32>
    %30 = arith.mulf %28, %29 : vector<1x128xf32>
    %31 = vector.extract_strided_slice %0 {offsets = [2, 0], sizes = [1, 128], strides = [1, 1]} : vector<16x128xf32> to vector<1x128xf32>
    %cst_15 = arith.constant 9.99999974E-6 : f32
    %32 = vector.broadcast %cst_15 : f32 to vector<1x128xf32>
    %33 = arith.addf %30, %32 : vector<1x128xf32>
    %34 = math.rsqrt %33 : vector<1x128xf32>
    %35 = arith.mulf %31, %34 : vector<1x128xf32>
    %36 = vector.extract_strided_slice %0 {offsets = [3, 0], sizes = [1, 128], strides = [1, 1]} : vector<16x128xf32> to vector<1x128xf32>
    %37 = arith.mulf %21, %35 : vector<1x128xf32>
    %38 = arith.subf %36, %37 : vector<1x128xf32>
    %39 = vector.broadcast %35 : vector<1x128xf32> to vector<8x128xf32>
    %40 = arith.mulf %17, %39 : vector<8x128xf32>
    %41 = vector.broadcast %38 : vector<1x128xf32> to vector<8x128xf32>
    %42 = arith.addf %40, %41 : vector<8x128xf32>
    %c2 = arith.constant 2 : index
    %c0_16 = arith.constant 0 : index
    %c0_17 = arith.constant 0 : index
    %43 = vector.load %arg1[%c2, %c0_16, %c0_17] : memref<6x128x128xf32, #tpu.memory_space<vmem>>, vector<1x128x128xf32>
    %44 = vector.shape_cast %43 : vector<1x128x128xf32> to vector<128x128xf32>
    %cst_18 = arith.constant dense<0.000000e+00> : vector<8x128xf32>
    %45 = tpu.matmul %42, %44, %cst_18 {dimension_numbers = #tpu.dot_dimension_numbers<[1], [0], [0], [1], [0, 0, 1, 1], [], []>} : vector<8x128xf32>, vector<128x128xf32>, vector<8x128xf32> -> vector<8x128xf32>
    %46 = vector.extract_strided_slice %0 {offsets = [4, 0], sizes = [1, 128], strides = [1, 1]} : vector<16x128xf32> to vector<1x128xf32>
    %47 = vector.broadcast %46 : vector<1x128xf32> to vector<8x128xf32>
    %48 = arith.addf %45, %47 : vector<8x128xf32>
    %cst_19 = arith.constant 0.000000e+00 : f32
    %49 = vector.broadcast %cst_19 : f32 to vector<8x128xf32>
    %50 = arith.maximumf %48, %49 : vector<8x128xf32>
    %cst_20 = arith.constant dense<0.000000e+00> : vector<128xf32>
    %51 = vector.multi_reduction <add>, %50, %cst_20 [0] : vector<8x128xf32> to vector<128xf32>
    %52 = vector.shape_cast %51 : vector<128xf32> to vector<1x128xf32>
    %cst_21 = arith.constant 1.250000e-01 : f32
    %53 = vector.broadcast %cst_21 : f32 to vector<1x128xf32>
    %54 = arith.mulf %52, %53 : vector<1x128xf32>
    %55 = vector.broadcast %54 : vector<1x128xf32> to vector<8x128xf32>
    %56 = arith.subf %50, %55 : vector<8x128xf32>
    %57 = vector.broadcast %54 : vector<1x128xf32> to vector<8x128xf32>
    %58 = arith.subf %50, %57 : vector<8x128xf32>
    %59 = arith.mulf %56, %58 : vector<8x128xf32>
    %cst_22 = arith.constant dense<0.000000e+00> : vector<128xf32>
    %60 = vector.multi_reduction <add>, %59, %cst_22 [0] : vector<8x128xf32> to vector<128xf32>
    %61 = vector.shape_cast %60 : vector<128xf32> to vector<1x128xf32>
    %cst_23 = arith.constant 1.250000e-01 : f32
    %62 = vector.broadcast %cst_23 : f32 to vector<1x128xf32>
    %63 = arith.mulf %61, %62 : vector<1x128xf32>
    %64 = vector.extract_strided_slice %0 {offsets = [5, 0], sizes = [1, 128], strides = [1, 1]} : vector<16x128xf32> to vector<1x128xf32>
    %cst_24 = arith.constant 9.99999974E-6 : f32
    %65 = vector.broadcast %cst_24 : f32 to vector<1x128xf32>
    %66 = arith.addf %63, %65 : vector<1x128xf32>
    %67 = math.rsqrt %66 : vector<1x128xf32>
    %68 = arith.mulf %64, %67 : vector<1x128xf32>
    %69 = vector.extract_strided_slice %0 {offsets = [6, 0], sizes = [1, 128], strides = [1, 1]} : vector<16x128xf32> to vector<1x128xf32>
    %70 = arith.mulf %54, %68 : vector<1x128xf32>
    %71 = arith.subf %69, %70 : vector<1x128xf32>
    %72 = vector.broadcast %68 : vector<1x128xf32> to vector<8x128xf32>
    %73 = arith.mulf %50, %72 : vector<8x128xf32>
    %74 = vector.broadcast %71 : vector<1x128xf32> to vector<8x128xf32>
    %75 = arith.addf %73, %74 : vector<8x128xf32>
    %c3 = arith.constant 3 : index
    %c0_25 = arith.constant 0 : index
    %c0_26 = arith.constant 0 : index
    %76 = vector.load %arg1[%c3, %c0_25, %c0_26] : memref<6x128x128xf32, #tpu.memory_space<vmem>>, vector<1x128x128xf32>
    %77 = vector.shape_cast %76 : vector<1x128x128xf32> to vector<128x128xf32>
    %cst_27 = arith.constant dense<0.000000e+00> : vector<8x128xf32>
    %78 = tpu.matmul %75, %77, %cst_27 {dimension_numbers = #tpu.dot_dimension_numbers<[1], [0], [0], [1], [0, 0, 1, 1], [], []>} : vector<8x128xf32>, vector<128x128xf32>, vector<8x128xf32> -> vector<8x128xf32>
    %79 = vector.extract_strided_slice %0 {offsets = [7, 0], sizes = [1, 128], strides = [1, 1]} : vector<16x128xf32> to vector<1x128xf32>
    %80 = vector.broadcast %79 : vector<1x128xf32> to vector<8x128xf32>
    %81 = arith.addf %78, %80 : vector<8x128xf32>
    %cst_28 = arith.constant 0.000000e+00 : f32
    %82 = vector.broadcast %cst_28 : f32 to vector<8x128xf32>
    %83 = arith.maximumf %81, %82 : vector<8x128xf32>
    %cst_29 = arith.constant dense<0.000000e+00> : vector<128xf32>
    %84 = vector.multi_reduction <add>, %83, %cst_29 [0] : vector<8x128xf32> to vector<128xf32>
    %85 = vector.shape_cast %84 : vector<128xf32> to vector<1x128xf32>
    %cst_30 = arith.constant 1.250000e-01 : f32
    %86 = vector.broadcast %cst_30 : f32 to vector<1x128xf32>
    %87 = arith.mulf %85, %86 : vector<1x128xf32>
    %88 = vector.broadcast %87 : vector<1x128xf32> to vector<8x128xf32>
    %89 = arith.subf %83, %88 : vector<8x128xf32>
    %90 = vector.broadcast %87 : vector<1x128xf32> to vector<8x128xf32>
    %91 = arith.subf %83, %90 : vector<8x128xf32>
    %92 = arith.mulf %89, %91 : vector<8x128xf32>
    %cst_31 = arith.constant dense<0.000000e+00> : vector<128xf32>
    %93 = vector.multi_reduction <add>, %92, %cst_31 [0] : vector<8x128xf32> to vector<128xf32>
    %94 = vector.shape_cast %93 : vector<128xf32> to vector<1x128xf32>
    %cst_32 = arith.constant 1.250000e-01 : f32
    %95 = vector.broadcast %cst_32 : f32 to vector<1x128xf32>
    %96 = arith.mulf %94, %95 : vector<1x128xf32>
    %97 = vector.extract_strided_slice %0 {offsets = [8, 0], sizes = [1, 128], strides = [1, 1]} : vector<16x128xf32> to vector<1x128xf32>
    %cst_33 = arith.constant 9.99999974E-6 : f32
    %98 = vector.broadcast %cst_33 : f32 to vector<1x128xf32>
    %99 = arith.addf %96, %98 : vector<1x128xf32>
    %100 = math.rsqrt %99 : vector<1x128xf32>
    %101 = arith.mulf %97, %100 : vector<1x128xf32>
    %102 = vector.extract_strided_slice %0 {offsets = [9, 0], sizes = [1, 128], strides = [1, 1]} : vector<16x128xf32> to vector<1x128xf32>
    %103 = arith.mulf %87, %101 : vector<1x128xf32>
    %104 = arith.subf %102, %103 : vector<1x128xf32>
    %105 = vector.broadcast %101 : vector<1x128xf32> to vector<8x128xf32>
    %106 = arith.mulf %83, %105 : vector<8x128xf32>
    %107 = vector.broadcast %104 : vector<1x128xf32> to vector<8x128xf32>
    %108 = arith.addf %106, %107 : vector<8x128xf32>
    %c4 = arith.constant 4 : index
    %c0_34 = arith.constant 0 : index
    %c0_35 = arith.constant 0 : index
    %109 = vector.load %arg1[%c4, %c0_34, %c0_35] : memref<6x128x128xf32, #tpu.memory_space<vmem>>, vector<1x128x128xf32>
    %110 = vector.shape_cast %109 : vector<1x128x128xf32> to vector<128x128xf32>
    %cst_36 = arith.constant dense<0.000000e+00> : vector<8x128xf32>
    %111 = tpu.matmul %108, %110, %cst_36 {dimension_numbers = #tpu.dot_dimension_numbers<[1], [0], [0], [1], [0, 0, 1, 1], [], []>} : vector<8x128xf32>, vector<128x128xf32>, vector<8x128xf32> -> vector<8x128xf32>
    %112 = vector.extract_strided_slice %0 {offsets = [10, 0], sizes = [1, 128], strides = [1, 1]} : vector<16x128xf32> to vector<1x128xf32>
    %113 = vector.broadcast %112 : vector<1x128xf32> to vector<8x128xf32>
    %114 = arith.addf %111, %113 : vector<8x128xf32>
    %cst_37 = arith.constant 0.000000e+00 : f32
    %115 = vector.broadcast %cst_37 : f32 to vector<8x128xf32>
    %116 = arith.maximumf %114, %115 : vector<8x128xf32>
    %cst_38 = arith.constant dense<0.000000e+00> : vector<128xf32>
    %117 = vector.multi_reduction <add>, %116, %cst_38 [0] : vector<8x128xf32> to vector<128xf32>
    %118 = vector.shape_cast %117 : vector<128xf32> to vector<1x128xf32>
    %cst_39 = arith.constant 1.250000e-01 : f32
    %119 = vector.broadcast %cst_39 : f32 to vector<1x128xf32>
    %120 = arith.mulf %118, %119 : vector<1x128xf32>
    %121 = vector.broadcast %120 : vector<1x128xf32> to vector<8x128xf32>
    %122 = arith.subf %116, %121 : vector<8x128xf32>
    %123 = vector.broadcast %120 : vector<1x128xf32> to vector<8x128xf32>
    %124 = arith.subf %116, %123 : vector<8x128xf32>
    %125 = arith.mulf %122, %124 : vector<8x128xf32>
    %cst_40 = arith.constant dense<0.000000e+00> : vector<128xf32>
    %126 = vector.multi_reduction <add>, %125, %cst_40 [0] : vector<8x128xf32> to vector<128xf32>
    %127 = vector.shape_cast %126 : vector<128xf32> to vector<1x128xf32>
    %cst_41 = arith.constant 1.250000e-01 : f32
    %128 = vector.broadcast %cst_41 : f32 to vector<1x128xf32>
    %129 = arith.mulf %127, %128 : vector<1x128xf32>
    %130 = vector.extract_strided_slice %0 {offsets = [11, 0], sizes = [1, 128], strides = [1, 1]} : vector<16x128xf32> to vector<1x128xf32>
    %cst_42 = arith.constant 9.99999974E-6 : f32
    %131 = vector.broadcast %cst_42 : f32 to vector<1x128xf32>
    %132 = arith.addf %129, %131 : vector<1x128xf32>
    %133 = math.rsqrt %132 : vector<1x128xf32>
    %134 = arith.mulf %130, %133 : vector<1x128xf32>
    %135 = vector.extract_strided_slice %0 {offsets = [12, 0], sizes = [1, 128], strides = [1, 1]} : vector<16x128xf32> to vector<1x128xf32>
    %136 = arith.mulf %120, %134 : vector<1x128xf32>
    %137 = arith.subf %135, %136 : vector<1x128xf32>
    %138 = vector.broadcast %134 : vector<1x128xf32> to vector<8x128xf32>
    %139 = arith.mulf %116, %138 : vector<8x128xf32>
    %140 = vector.broadcast %137 : vector<1x128xf32> to vector<8x128xf32>
    %141 = arith.addf %139, %140 : vector<8x128xf32>
    %c5 = arith.constant 5 : index
    %c0_43 = arith.constant 0 : index
    %c0_44 = arith.constant 0 : index
    %142 = vector.load %arg1[%c5, %c0_43, %c0_44] : memref<6x128x128xf32, #tpu.memory_space<vmem>>, vector<1x128x128xf32>
    %143 = vector.shape_cast %142 : vector<1x128x128xf32> to vector<128x128xf32>
    %cst_45 = arith.constant dense<0.000000e+00> : vector<8x128xf32>
    %144 = tpu.matmul %141, %143, %cst_45 {dimension_numbers = #tpu.dot_dimension_numbers<[1], [0], [0], [1], [0, 0, 1, 1], [], []>} : vector<8x128xf32>, vector<128x128xf32>, vector<8x128xf32> -> vector<8x128xf32>
    %145 = vector.extract_strided_slice %0 {offsets = [13, 0], sizes = [1, 128], strides = [1, 1]} : vector<16x128xf32> to vector<1x128xf32>
    %146 = vector.broadcast %145 : vector<1x128xf32> to vector<8x128xf32>
    %147 = arith.addf %144, %146 : vector<8x128xf32>
    %c0_46 = arith.constant 0 : index
    %c0_47 = arith.constant 0 : index
    %148 = vector.load %arg3[%c0_46, %c0_47] : memref<8x128xf32, #tpu.memory_space<vmem>>, vector<8x128xf32>
    tpu.vector_store %arg3[%c0_46, %c0_47], %147 {strides = array<i32>} : memref<8x128xf32, #tpu.memory_space<vmem>>, vector<8x128xf32>,
    return
  }
}

</mosaic_0001>

<llo_original>
// kernel: tpu_custom_call.1
$region0: #{tpu_custom_call.1}
  #allocation0 [shape = 'u32[]', space=smem, size = 0x4, offset = 0x4, fixed_abs, tag = 'smem constant byte address 0x4 - core index']
  #allocation1 [shape = 'u32[144,128]{1,0:T(1,128)}', space=vmem, size = 0x12000, scoped, tag = 'internal scratch']
  %s0 = inlined_call_operand.hbm [shape: f32[8,128], index: 0, kind: input, shape index: {}]
  %s1 = inlined_call_operand.hbm [shape: f32[6,128,128], index: 1, kind: input, shape index: {}]
  %s2 = inlined_call_operand.hbm [shape: f32[16,128], index: 2, kind: input, shape index: {}]
  %s3 = inlined_call_operand.hbm [shape: f32[8,128], index: 3, kind: output, shape index: {}]
  %s4 = sld [smem:[#allocation0]]
  $region34: #{tpu_custom_call.1} parent=0
    _
  %s6 = ssub.s32 1, %s4
  %s7 = scalar_select 0, %s6, %s4
  $region1: #{tpu_custom_call.1} parent=0
    #allocation2 [shape = 'u8[4096]{0}', space=vmem, size = 0x1000, scoped, tag = 'input window, operand 0, single buffered']
    #allocation3 [shape = 's32[1]{0}', space=sflag, size = 0x4, scoped, tag = 'scoped memory for tpu_custom_call.1']
    #allocation4 [shape = 's32[1]{0}', space=sflag, size = 0x4, scoped, tag = 'scoped memory for tpu_custom_call.1']
    #allocation5 [shape = 'u8[393216]{0}', space=vmem, size = 0x60000, scoped, tag = 'input window, operand 1, single buffered']
    #allocation6 [shape = 's32[1]{0}', space=sflag, size = 0x4, scoped, tag = 'scoped memory for tpu_custom_call.1']
    #allocation7 [shape = 'u8[8192]{0}', space=vmem, size = 0x2000, scoped, tag = 'input window, operand 2, single buffered']
    #allocation8 [shape = 'u8[4096]{0}', space=vmem, size = 0x1000, scoped, tag = 'output window, operand 0, single buffered']
    %8 = vsyncpa [#allocation3], 0
    %9 = vsyncpa [#allocation6], 0
    %10 = vsyncpa [#allocation4], 0
    // Predicated region
    $region2: #{tpu_custom_call.1} parent=1 // pred_check
      _
    $region3: #{tpu_custom_call.1} parent=1 // pred_check_branch
      %12 = sbr.rel (0) target = $region5
    $region4: #{tpu_custom_call.1} parent=1 // pred_region
      %s14 = ssub.s32 128, 128
      %15 = vsyncadd [#allocation3], %s14
      %s17 = sshll.u32 [#allocation2], 4
      %s18 = int_to_ptr.vmem [resolvable:$true] %s17
      %20 = dma.hbm_to_vmem [thread:$0]  %s0, 128, %s18, [#allocation3]
    $region5: #{tpu_custom_call.1} parent=1 // pred_fallthru
      _
    // Predicated region
    $region6: #{tpu_custom_call.1} parent=1 // pred_check
      _
    $region7: #{tpu_custom_call.1} parent=1 // pred_check_branch
      %22 = sbr.rel (0) target = $region9
    $region8: #{tpu_custom_call.1} parent=1 // pred_region
      %s24 = ssub.s32 12288, 12288
      %25 = vsyncadd [#allocation6], %s24
      %s26 = sshll.u32 [#allocation5], 4
      %s27 = int_to_ptr.vmem [resolvable:$true] %s26
      %32 = dma.hbm_to_vmem [thread:$0]  %s1, 12288, %s27, [#allocation6], 128, 128, 8
    $region9: #{tpu_custom_call.1} parent=1 // pred_fallthru
      _
    // Predicated region
    $region10: #{tpu_custom_call.1} parent=1 // pred_check
      _
    $region11: #{tpu_custom_call.1} parent=1 // pred_check_branch
      %34 = sbr.rel (0) target = $region13
    $region12: #{tpu_custom_call.1} parent=1 // pred_region
      %s36 = ssub.s32 256, 256
      %37 = vsyncadd [#allocation6], %s36
      %s38 = sshll.u32 [#allocation7], 4
      %s39 = int_to_ptr.vmem [resolvable:$true] %s38
      %44 = dma.hbm_to_vmem [thread:$0]  %s2, 256, %s39, [#allocation6], 128, 128, 8
    $region13: #{tpu_custom_call.1} parent=1 // pred_fallthru
      _
    // Predicated region
    $region14: #{tpu_custom_call.1} parent=1 // pred_check
      _
    $region15: #{tpu_custom_call.1} parent=1 // pred_check_branch
      %46 = sbr.rel (0) target = $region17
    $region16: #{tpu_custom_call.1} parent=1 // pred_region
      %47 = dma.done [#allocation3], 128
    $region17: #{tpu_custom_call.1} parent=1 // pred_fallthru
      _
    // Predicated region
    $region18: #{tpu_custom_call.1} parent=1 // pred_check
      _
    $region19: #{tpu_custom_call.1} parent=1 // pred_check_branch
      %49 = sbr.rel (0) target = $region21
    $region20: #{tpu_custom_call.1} parent=1 // pred_region
      %50 = dma.done [#allocation6], 12288
    $region21: #{tpu_custom_call.1} parent=1 // pred_fallthru
      _
    // Predicated region
    $region22: #{tpu_custom_call.1} parent=1 // pred_check
      _
    $region23: #{tpu_custom_call.1} parent=1 // pred_check_branch
      %52 = sbr.rel (0) target = $region25
    $region24: #{tpu_custom_call.1} parent=1 // pred_region
      %53 = dma.done [#allocation6], 256
    $region25: #{tpu_custom_call.1} parent=1 // pred_fallthru
      _
    %v54 = vld [vmem:[#allocation7] sm:$0xff]
    %v55 = vld [vmem:[#allocation7 + $0x8] sm:$0xff]
    %v56 = vld [vmem:[#allocation2] sm:$0xff]
    %v57 = vld [vmem:[#allocation5] sm:$0xff]
    %v58 = vld [vmem:[#allocation5 + $0x8] sm:$0xff]
    %v59 = vld [vmem:[#allocation5 + $0x10] sm:$0xff]
    %v60 = vld [vmem:[#allocation5 + $0x18] sm:$0xff]
    %v61 = vld [vmem:[#allocation5 + $0x20] sm:$0xff]
    %v62 = vld [vmem:[#allocation5 + $0x28] sm:$0xff]
    %v63 = vld [vmem:[#allocation5 + $0x30] sm:$0xff]
    %v64 = vld [vmem:[#allocation5 + $0x38] sm:$0xff]
    %v65 = vld [vmem:[#allocation5 + $0x40] sm:$0xff]
    %v66 = vld [vmem:[#allocation5 + $0x48] sm:$0xff]
    %v67 = vld [vmem:[#allocation5 + $0x50] sm:$0xff]
    %v68 = vld [vmem:[#allocation5 + $0x58] sm:$0xff]
    %v69 = vld [vmem:[#allocation5 + $0x60] sm:$0xff]
    %v70 = vld [vmem:[#allocation5 + $0x68] sm:$0xff]
    %v71 = vld [vmem:[#allocation5 + $0x70] sm:$0xff]
    %v72 = vld [vmem:[#allocation5 + $0x78] sm:$0xff]
    %v73 = vlaneseq
    %v74 = vshrl.u32 %v73, 7
    %v75 = vsub.s32 0, %v74
    %v76 = vrot.slane %v54, %v75
    %77 = vmatprep.subr.mxu0 0.0
    %78 = vmatpush1.msra.mxu0 %v72
    %79 = vmatprep.subr.mxu0 0.0
    %80 = vmatpush1.msra.mxu0 %v71
    %81 = vmatprep.subr.mxu0 0.0
    %82 = vmatpush1.msra.mxu0 %v70
    %83 = vmatprep.subr.mxu0 0.0
    %84 = vmatpush1.msra.mxu0 %v69
    %85 = vmatprep.subr.mxu0 0.0
    %86 = vmatpush1.msra.mxu0 %v68
    %87 = vmatprep.subr.mxu0 0.0
    %88 = vmatpush1.msra.mxu0 %v67
    %89 = vmatprep.subr.mxu0 0.0
    %90 = vmatpush1.msra.mxu0 %v66
    %91 = vmatprep.subr.mxu0 0.0
    %92 = vmatpush1.msra.mxu0 %v65
    %93 = vmatprep.subr.mxu0 0.0
    %94 = vmatpush1.msra.mxu0 %v64
    %95 = vmatprep.subr.mxu0 0.0
    %96 = vmatpush1.msra.mxu0 %v63
    %97 = vmatprep.subr.mxu0 0.0
    %98 = vmatpush1.msra.mxu0 %v62
    %99 = vmatprep.subr.mxu0 0.0
    %100 = vmatpush1.msra.mxu0 %v61
    %101 = vmatprep.subr.mxu0 0.0
    %102 = vmatpush1.msra.mxu0 %v60
    %103 = vmatprep.subr.mxu0 0.0
    %104 = vmatpush1.msra.mxu0 %v59
    %105 = vmatprep.subr.mxu0 0.0
    %106 = vmatpush1.msra.mxu0 %v58
    %107 = vmatprep.subr.mxu0 0.0
    %108 = vmatpush1.msra.mxu0 %v57
    %109 = vmatprep.subr.mxu0 0.0
    %110 = vmatpush2.msra.mxu0 0.0
    %111 = vmatprep.subr.mxu0 0.0
    %112 = vmatpush2.msra.mxu0 0.0
    %113 = vmatprep.subr.mxu0 0.0
    %114 = vmatpush2.msra.mxu0 0.0
    %115 = vmatprep.subr.mxu0 0.0
    %116 = vmatpush2.msra.mxu0 0.0
    %117 = vmatprep.subr.mxu0 0.0
    %118 = vmatpush2.msra.mxu0 0.0
    %119 = vmatprep.subr.mxu0 0.0
    %120 = vmatpush2.msra.mxu0 0.0
    %121 = vmatprep.subr.mxu0 0.0
    %122 = vmatpush2.msra.mxu0 0.0
    %123 = vmatprep.subr.mxu0 0.0
    %124 = vmatpush2.msra.mxu0 0.0
    %125 = vmatprep.subr.mxu0 0.0
    %126 = vmatpush2.msra.mxu0 0.0
    %127 = vmatprep.subr.mxu0 0.0
    %128 = vmatpush2.msra.mxu0 0.0
    %129 = vmatprep.subr.mxu0 0.0
    %130 = vmatpush2.msra.mxu0 0.0
    %131 = vmatprep.subr.mxu0 0.0
    %132 = vmatpush2.msra.mxu0 0.0
    %133 = vmatprep.subr.mxu0 0.0
    %134 = vmatpush2.msra.mxu0 0.0
    %135 = vmatprep.subr.mxu0 0.0
    %136 = vmatpush2.msra.mxu0 0.0
    %137 = vmatprep.subr.mxu0 0.0
    %138 = vmatpush2.msra.mxu0 0.0
    %139 = vmatprep.subr.mxu0 0.0
    %140 = vmatpush2.msra.mxu0 0.0
    %141 = vmatprep.mubr.f32.mxu0 0.0
    %142 = vmatmul.mubr.f32.gmra.mxu0 %v56
    %v143 = vpop.f32.mrf.mxu0
    %v144 = vadd.f32 %v76, %v143
    %v145 = vpop.f32.mrf.mxu0
    %146 = vdwg.mxu0
    %v147 = vmax.f32 %v144, 0.0
    %s148 = scalar_lea.vmem [#allocation5], 128
    %v149 = vld [vmem:[%s148] sm:$0xff]
    %v150 = vld [vmem:[%s148 + $0x8] sm:$0xff]
    %v151 = vld [vmem:[%s148 + $0x10] sm:$0xff]
    %v152 = vld [vmem:[%s148 + $0x18] sm:$0xff]
    %v153 = vld [vmem:[%s148 + $0x20] sm:$0xff]
    %v154 = vld [vmem:[%s148 + $0x28] sm:$0xff]
    %v155 = vld [vmem:[%s148 + $0x30] sm:$0xff]
    %v156 = vld [vmem:[%s148 + $0x38] sm:$0xff]
    %v157 = vld [vmem:[%s148 + $0x40] sm:$0xff]
    %v158 = vld [vmem:[%s148 + $0x48] sm:$0xff]
    %v159 = vld [vmem:[%s148 + $0x50] sm:$0xff]
    %v160 = vld [vmem:[%s148 + $0x58] sm:$0xff]
    %v161 = vld [vmem:[%s148 + $0x60] sm:$0xff]
    %v162 = vld [vmem:[%s148 + $0x68] sm:$0xff]
    %v163 = vld [vmem:[%s148 + $0x70] sm:$0xff]
    %v164 = vld [vmem:[%s148 + $0x78] sm:$0xff]
    %v165 = vlaneseq
    %v166 = vshrl.u32 %v165, 7
    %v167 = vsub.s32 1, %v166
    %v168 = vrot.slane %v54, %v167
    %169 = vmatprep.subr.mxu0 0.0
    %170 = vmatpush1.msra.mxu0 %v164
    %171 = vmatprep.subr.mxu0 0.0
    %172 = vmatpush1.msra.mxu0 %v163
    %173 = vmatprep.subr.mxu0 0.0
    %174 = vmatpush1.msra.mxu0 %v162
    %175 = vmatprep.subr.mxu0 0.0
    %176 = vmatpush1.msra.mxu0 %v161
    %177 = vmatprep.subr.mxu0 0.0
    %178 = vmatpush1.msra.mxu0 %v160
    %179 = vmatprep.subr.mxu0 0.0
    %180 = vmatpush1.msra.mxu0 %v159
    %181 = vmatprep.subr.mxu0 0.0
    %182 = vmatpush1.msra.mxu0 %v158
    %183 = vmatprep.subr.mxu0 0.0
    %184 = vmatpush1.msra.mxu0 %v157
    %185 = vmatprep.subr.mxu0 0.0
    %186 = vmatpush1.msra.mxu0 %v156
    %187 = vmatprep.subr.mxu0 0.0
    %188 = vmatpush1.msra.mxu0 %v155
    %189 = vmatprep.subr.mxu0 0.0
    %190 = vmatpush1.msra.mxu0 %v154
    %191 = vmatprep.subr.mxu0 0.0
    %192 = vmatpush1.msra.mxu0 %v153
    %193 = vmatprep.subr.mxu0 0.0
    %194 = vmatpush1.msra.mxu0 %v152
    %195 = vmatprep.subr.mxu0 0.0
    %196 = vmatpush1.msra.mxu0 %v151
    %197 = vmatprep.subr.mxu0 0.0
    %198 = vmatpush1.msra.mxu0 %v150
    %199 = vmatprep.subr.mxu0 0.0
    %200 = vmatpush1.msra.mxu0 %v149
    %201 = vmatprep.subr.mxu0 0.0
    %202 = vmatpush2.msra.mxu0 0.0
    %203 = vmatprep.subr.mxu0 0.0
    %204 = vmatpush2.msra.mxu0 0.0
    %205 = vmatprep.subr.mxu0 0.0
    %206 = vmatpush2.msra.mxu0 0.0
    %207 = vmatprep.subr.mxu0 0.0
    %208 = vmatpush2.msra.mxu0 0.0
    %209 = vmatprep.subr.mxu0 0.0
    %210 = vmatpush2.msra.mxu0 0.0
    %211 = vmatprep.subr.mxu0 0.0
    %212 = vmatpush2.msra.mxu0 0.0
    %213 = vmatprep.subr.mxu0 0.0
    %214 = vmatpush2.msra.mxu0 0.0
    %215 = vmatprep.subr.mxu0 0.0
    %216 = vmatpush2.msra.mxu0 0.0
    %217 = vmatprep.subr.mxu0 0.0
    %218 = vmatpush2.msra.mxu0 0.0
    %219 = vmatprep.subr.mxu0 0.0
    %220 = vmatpush2.msra.mxu0 0.0
    %221 = vmatprep.subr.mxu0 0.0
    %222 = vmatpush2.msra.mxu0 0.0
    %223 = vmatprep.subr.mxu0 0.0
    %224 = vmatpush2.msra.mxu0 0.0
    %225 = vmatprep.subr.mxu0 0.0
    %226 = vmatpush2.msra.mxu0 0.0
    %227 = vmatprep.subr.mxu0 0.0
    %228 = vmatpush2.msra.mxu0 0.0
    %229 = vmatprep.subr.mxu0 0.0
    %230 = vmatpush2.msra.mxu0 0.0
    %231 = vmatprep.subr.mxu0 0.0
    %232 = vmatpush2.msra.mxu0 0.0
    %233 = vmatprep.mubr.f32.mxu0 0.0
    %234 = vmatmul.mubr.f32.gmra.mxu0 %v147
    %v235 = vpop.f32.mrf.mxu0
    %v236 = vadd.f32 %v168, %v235
    %v237 = vpop.f32.mrf.mxu0
    %238 = vdwg.mxu0
    %v239 = vmax.f32 %v236, 0.0
    %v240 = vrot.slane %v239, 4
    %v241 = vadd.f32 %v239, %v240
    %v242 = vrot.slane %v241, 2
    %v243 = vadd.f32 %v241, %v242
    %v244 = vrot.slane %v243, 1
    %v245 = vadd.f32 %v243, %v244
    %v246 = vmul.f32 %v245, 0.125
    %v247 = vsub.f32 %v239, %v246
    %v248 = vmul.f32 %v247, %v247
    %v249 = vrot.slane %v248, 4
    %v250 = vadd.f32 %v248, %v249
    %v251 = vrot.slane %v250, 2
    %v252 = vadd.f32 %v250, %v251
    %v253 = vrot.slane %v252, 1
    %v254 = vadd.f32 %v252, %v253
    %v255 = vmul.f32 %v254, 0.125
    %v256 = vadd.f32 %v255, 1e-05
    %v257 = vrsqrt.pop %v256
    %v258 = vmul.f32 %v54, %v257
    %v259 = vmul.f32 %v246, %v258
    %v261 = vrot.slane %v259, 7
    %v263 = vsub.f32 %v54, %v261
    %v264 = vlaneseq
    %v265 = vshrl.u32 %v264, 7
    %v266 = vsub.s32 2, %v265
    %v267 = vrot.slane %v258, %v266
    %v268 = vmul.f32 %v239, %v267
    %v269 = vlaneseq
    %v270 = vshrl.u32 %v269, 7
    %v271 = vsub.s32 3, %v270
    %v272 = vrot.slane %v263, %v271
    %v273 = vadd.f32 %v268, %v272
    %s274 = scalar_lea.vmem [#allocation5], 256
    %v275 = vld [vmem:[%s274] sm:$0xff]
    %v276 = vld [vmem:[%s274 + $0x8] sm:$0xff]
    %v277 = vld [vmem:[%s274 + $0x10] sm:$0xff]
    %v278 = vld [vmem:[%s274 + $0x18] sm:$0xff]
    %v279 = vld [vmem:[%s274 + $0x20] sm:$0xff]
    %v280 = vld [vmem:[%s274 + $0x28] sm:$0xff]
    %v281 = vld [vmem:[%s274 + $0x30] sm:$0xff]
    %v282 = vld [vmem:[%s274 + $0x38] sm:$0xff]
    %v283 = vld [vmem:[%s274 + $0x40] sm:$0xff]
    %v284 = vld [vmem:[%s274 + $0x48] sm:$0xff]
    %v285 = vld [vmem:[%s274 + $0x50] sm:$0xff]
    %v286 = vld [vmem:[%s274 + $0x58] sm:$0xff]
    %v287 = vld [vmem:[%s274 + $0x60] sm:$0xff]
    %v288 = vld [vmem:[%s274 + $0x68] sm:$0xff]
    %v289 = vld [vmem:[%s274 + $0x70] sm:$0xff]
    %v290 = vld [vmem:[%s274 + $0x78] sm:$0xff]
    %v291 = vlaneseq
    %v292 = vshrl.u32 %v291, 7
    %v293 = vsub.s32 4, %v292
    %v294 = vrot.slane %v54, %v293
    %295 = vmatprep.subr.mxu0 0.0
    %296 = vmatpush1.msra.mxu0 %v290
    %297 = vmatprep.subr.mxu0 0.0
    %298 = vmatpush1.msra.mxu0 %v289
    %299 = vmatprep.subr.mxu0 0.0
    %300 = vmatpush1.msra.mxu0 %v288
    %301 = vmatprep.subr.mxu0 0.0
    %302 = vmatpush1.msra.mxu0 %v287
    %303 = vmatprep.subr.mxu0 0.0
    %304 = vmatpush1.msra.mxu0 %v286
    %305 = vmatprep.subr.mxu0 0.0
    %306 = vmatpush1.msra.mxu0 %v285
    %307 = vmatprep.subr.mxu0 0.0
    %308 = vmatpush1.msra.mxu0 %v284
    %309 = vmatprep.subr.mxu0 0.0
    %310 = vmatpush1.msra.mxu0 %v283
    %311 = vmatprep.subr.mxu0 0.0
    %312 = vmatpush1.msra.mxu0 %v282
    %313 = vmatprep.subr.mxu0 0.0
    %314 = vmatpush1.msra.mxu0 %v281
    %315 = vmatprep.subr.mxu0 0.0
    %316 = vmatpush1.msra.mxu0 %v280
    %317 = vmatprep.subr.mxu0 0.0
    %318 = vmatpush1.msra.mxu0 %v279
    %319 = vmatprep.subr.mxu0 0.0
    %320 = vmatpush1.msra.mxu0 %v278
    %321 = vmatprep.subr.mxu0 0.0
    %322 = vmatpush1.msra.mxu0 %v277
    %323 = vmatprep.subr.mxu0 0.0
    %324 = vmatpush1.msra.mxu0 %v276
    %325 = vmatprep.subr.mxu0 0.0
    %326 = vmatpush1.msra.mxu0 %v275
    %327 = vmatprep.subr.mxu0 0.0
    %328 = vmatpush2.msra.mxu0 0.0
    %329 = vmatprep.subr.mxu0 0.0
    %330 = vmatpush2.msra.mxu0 0.0
    %331 = vmatprep.subr.mxu0 0.0
    %332 = vmatpush2.msra.mxu0 0.0
    %333 = vmatprep.subr.mxu0 0.0
    %334 = vmatpush2.msra.mxu0 0.0
    %335 = vmatprep.subr.mxu0 0.0
    %336 = vmatpush2.msra.mxu0 0.0
    %337 = vmatprep.subr.mxu0 0.0
    %338 = vmatpush2.msra.mxu0 0.0
    %339 = vmatprep.subr.mxu0 0.0
    %340 = vmatpush2.msra.mxu0 0.0
    %341 = vmatprep.subr.mxu0 0.0
    %342 = vmatpush2.msra.mxu0 0.0
    %343 = vmatprep.subr.mxu0 0.0
    %344 = vmatpush2.msra.mxu0 0.0
    %345 = vmatprep.subr.mxu0 0.0
    %346 = vmatpush2.msra.mxu0 0.0
    %347 = vmatprep.subr.mxu0 0.0
    %348 = vmatpush2.msra.mxu0 0.0
    %349 = vmatprep.subr.mxu0 0.0
    %350 = vmatpush2.msra.mxu0 0.0
    %351 = vmatprep.subr.mxu0 0.0
    %352 = vmatpush2.msra.mxu0 0.0
    %353 = vmatprep.subr.mxu0 0.0
    %354 = vmatpush2.msra.mxu0 0.0
    %355 = vmatprep.subr.mxu0 0.0
    %356 = vmatpush2.msra.mxu0 0.0
    %357 = vmatprep.subr.mxu0 0.0
    %358 = vmatpush2.msra.mxu0 0.0
    %359 = vmatprep.mubr.f32.mxu0 0.0
    %360 = vmatmul.mubr.f32.gmra.mxu0 %v273
    %v361 = vpop.f32.mrf.mxu0
    %v362 = vadd.f32 %v294, %v361
    %v363 = vpop.f32.mrf.mxu0
    %364 = vdwg.mxu0
    %v365 = vmax.f32 %v362, 0.0
    %v366 = vrot.slane %v365, 4
    %v367 = vadd.f32 %v365, %v366
    %v368 = vrot.slane %v367, 2
    %v369 = vadd.f32 %v367, %v368
    %v370 = vrot.slane %v369, 1
    %v371 = vadd.f32 %v369, %v370
    %v372 = vmul.f32 %v371, 0.125
    %v373 = vsub.f32 %v365, %v372
    %v374 = vmul.f32 %v373, %v373
    %v375 = vrot.slane %v374, 4
    %v376 = vadd.f32 %v374, %v375
    %v377 = vrot.slane %v376, 2
    %v378 = vadd.f32 %v376, %v377
    %v379 = vrot.slane %v378, 1
    %v380 = vadd.f32 %v378, %v379
    %v381 = vmul.f32 %v380, 0.125
    %v382 = vadd.f32 %v381, 1e-05
    %v383 = vrsqrt.pop %v382
    %v384 = vmul.f32 %v54, %v383
    %v385 = vmul.f32 %v372, %v384
    %v387 = vrot.slane %v385, 7
    %v389 = vsub.f32 %v54, %v387
    %v390 = vlaneseq
    %v391 = vshrl.u32 %v390, 7
    %v392 = vsub.s32 5, %v391
    %v393 = vrot.slane %v384, %v392
    %v394 = vmul.f32 %v365, %v393
    %v395 = vlaneseq
    %v396 = vshrl.u32 %v395, 7
    %v397 = vsub.s32 6, %v396
    %v398 = vrot.slane %v389, %v397
    %v399 = vadd.f32 %v394, %v398
    %s400 = scalar_lea.vmem [#allocation5], 384
    %v401 = vld [vmem:[%s400] sm:$0xff]
    %v402 = vld [vmem:[%s400 + $0x8] sm:$0xff]
    %v403 = vld [vmem:[%s400 + $0x10] sm:$0xff]
    %v404 = vld [vmem:[%s400 + $0x18] sm:$0xff]
    %v405 = vld [vmem:[%s400 + $0x20] sm:$0xff]
    %v406 = vld [vmem:[%s400 + $0x28] sm:$0xff]
    %v407 = vld [vmem:[%s400 + $0x30] sm:$0xff]
    %v408 = vld [vmem:[%s400 + $0x38] sm:$0xff]
    %v409 = vld [vmem:[%s400 + $0x40] sm:$0xff]
    %v410 = vld [vmem:[%s400 + $0x48] sm:$0xff]
    %v411 = vld [vmem:[%s400 + $0x50] sm:$0xff]
    %v412 = vld [vmem:[%s400 + $0x58] sm:$0xff]
    %v413 = vld [vmem:[%s400 + $0x60] sm:$0xff]
    %v414 = vld [vmem:[%s400 + $0x68] sm:$0xff]
    %v415 = vld [vmem:[%s400 + $0x70] sm:$0xff]
    %v416 = vld [vmem:[%s400 + $0x78] sm:$0xff]
    %v417 = vlaneseq
    %v418 = vshrl.u32 %v417, 7
    %v419 = vsub.s32 7, %v418
    %v420 = vrot.slane %v54, %v419
    %421 = vmatprep.subr.mxu0 0.0
    %422 = vmatpush1.msra.mxu0 %v416
    %423 = vmatprep.subr.mxu0 0.0
    %424 = vmatpush1.msra.mxu0 %v415
    %425 = vmatprep.subr.mxu0 0.0
    %426 = vmatpush1.msra.mxu0 %v414
    %427 = vmatprep.subr.mxu0 0.0
    %428 = vmatpush1.msra.mxu0 %v413
    %429 = vmatprep.subr.mxu0 0.0
    %430 = vmatpush1.msra.mxu0 %v412
    %431 = vmatprep.subr.mxu0 0.0
    %432 = vmatpush1.msra.mxu0 %v411
    %433 = vmatprep.subr.mxu0 0.0
    %434 = vmatpush1.msra.mxu0 %v410
    %435 = vmatprep.subr.mxu0 0.0
    %436 = vmatpush1.msra.mxu0 %v409
    %437 = vmatprep.subr.mxu0 0.0
    %438 = vmatpush1.msra.mxu0 %v408
    %439 = vmatprep.subr.mxu0 0.0
    %440 = vmatpush1.msra.mxu0 %v407
    %441 = vmatprep.subr.mxu0 0.0
    %442 = vmatpush1.msra.mxu0 %v406
    %443 = vmatprep.subr.mxu0 0.0
    %444 = vmatpush1.msra.mxu0 %v405
    %445 = vmatprep.subr.mxu0 0.0
    %446 = vmatpush1.msra.mxu0 %v404
    %447 = vmatprep.subr.mxu0 0.0
    %448 = vmatpush1.msra.mxu0 %v403
    %449 = vmatprep.subr.mxu0 0.0
    %450 = vmatpush1.msra.mxu0 %v402
    %451 = vmatprep.subr.mxu0 0.0
    %452 = vmatpush1.msra.mxu0 %v401
    %453 = vmatprep.subr.mxu0 0.0
    %454 = vmatpush2.msra.mxu0 0.0
    %455 = vmatprep.subr.mxu0 0.0
    %456 = vmatpush2.msra.mxu0 0.0
    %457 = vmatprep.subr.mxu0 0.0
    %458 = vmatpush2.msra.mxu0 0.0
    %459 = vmatprep.subr.mxu0 0.0
    %460 = vmatpush2.msra.mxu0 0.0
    %461 = vmatprep.subr.mxu0 0.0
    %462 = vmatpush2.msra.mxu0 0.0
    %463 = vmatprep.subr.mxu0 0.0
    %464 = vmatpush2.msra.mxu0 0.0
    %465 = vmatprep.subr.mxu0 0.0
    %466 = vmatpush2.msra.mxu0 0.0
    %467 = vmatprep.subr.mxu0 0.0
    %468 = vmatpush2.msra.mxu0 0.0
    %469 = vmatprep.subr.mxu0 0.0
    %470 = vmatpush2.msra.mxu0 0.0
    %471 = vmatprep.subr.mxu0 0.0
    %472 = vmatpush2.msra.mxu0 0.0
    %473 = vmatprep.subr.mxu0 0.0
    %474 = vmatpush2.msra.mxu0 0.0
    %475 = vmatprep.subr.mxu0 0.0
    %476 = vmatpush2.msra.mxu0 0.0
    %477 = vmatprep.subr.mxu0 0.0
    %478 = vmatpush2.msra.mxu0 0.0
    %479 = vmatprep.subr.mxu0 0.0
    %480 = vmatpush2.msra.mxu0 0.0
    %481 = vmatprep.subr.mxu0 0.0
    %482 = vmatpush2.msra.mxu0 0.0
    %483 = vmatprep.subr.mxu0 0.0
    %484 = vmatpush2.msra.mxu0 0.0
    %485 = vmatprep.mubr.f32.mxu0 0.0
    %486 = vmatmul.mubr.f32.gmra.mxu0 %v399
    %v487 = vpop.f32.mrf.mxu0
    %v488 = vadd.f32 %v420, %v487
    %v489 = vpop.f32.mrf.mxu0
    %490 = vdwg.mxu0
    %v491 = vmax.f32 %v488, 0.0
    %v492 = vrot.slane %v491, 4
    %v493 = vadd.f32 %v491, %v492
    %v494 = vrot.slane %v493, 2
    %v495 = vadd.f32 %v493, %v494
    %v496 = vrot.slane %v495, 1
    %v497 = vadd.f32 %v495, %v496
    %v498 = vmul.f32 %v497, 0.125
    %v499 = vsub.f32 %v491, %v498
    %v500 = vmul.f32 %v499, %v499
    %v501 = vrot.slane %v500, 4
    %v502 = vadd.f32 %v500, %v501
    %v503 = vrot.slane %v502, 2
    %v504 = vadd.f32 %v502, %v503
    %v505 = vrot.slane %v504, 1
    %v506 = vadd.f32 %v504, %v505
    %v507 = vmul.f32 %v506, 0.125
    %v508 = vadd.f32 %v507, 1e-05
    %v509 = vrsqrt.pop %v508
    %v510 = vmul.f32 %v55, %v509
    %v511 = vmul.f32 %v498, %v510
    %v513 = vrot.slane %v511, 7
    %v515 = vsub.f32 %v55, %v513
    %v516 = vlaneseq
    %v517 = vshrl.u32 %v516, 7
    %v518 = vsub.s32 0, %v517
    %v519 = vrot.slane %v510, %v518
    %v520 = vmul.f32 %v491, %v519
    %v521 = vlaneseq
    %v522 = vshrl.u32 %v521, 7
    %v523 = vsub.s32 1, %v522
    %v524 = vrot.slane %v515, %v523
    %v525 = vadd.f32 %v520, %v524
    %s526 = scalar_lea.vmem [#allocation5], 512
    %v527 = vld [vmem:[%s526] sm:$0xff]
    %v528 = vld [vmem:[%s526 + $0x8] sm:$0xff]
    %v529 = vld [vmem:[%s526 + $0x10] sm:$0xff]
    %v530 = vld [vmem:[%s526 + $0x18] sm:$0xff]
    %v531 = vld [vmem:[%s526 + $0x20] sm:$0xff]
    %v532 = vld [vmem:[%s526 + $0x28] sm:$0xff]
    %v533 = vld [vmem:[%s526 + $0x30] sm:$0xff]
    %v534 = vld [vmem:[%s526 + $0x38] sm:$0xff]
    %v535 = vld [vmem:[%s526 + $0x40] sm:$0xff]
    %v536 = vld [vmem:[%s526 + $0x48] sm:$0xff]
    %v537 = vld [vmem:[%s526 + $0x50] sm:$0xff]
    %v538 = vld [vmem:[%s526 + $0x58] sm:$0xff]
    %v539 = vld [vmem:[%s526 + $0x60] sm:$0xff]
    %v540 = vld [vmem:[%s526 + $0x68] sm:$0xff]
    %v541 = vld [vmem:[%s526 + $0x70] sm:$0xff]
    %v542 = vld [vmem:[%s526 + $0x78] sm:$0xff]
    %v543 = vlaneseq
    %v544 = vshrl.u32 %v543, 7
    %v545 = vsub.s32 2, %v544
    %v546 = vrot.slane %v55, %v545
    %547 = vmatprep.subr.mxu0 0.0
    %548 = vmatpush1.msra.mxu0 %v542
    %549 = vmatprep.subr.mxu0 0.0
    %550 = vmatpush1.msra.mxu0 %v541
    %551 = vmatprep.subr.mxu0 0.0
    %552 = vmatpush1.msra.mxu0 %v540
    %553 = vmatprep.subr.mxu0 0.0
    %554 = vmatpush1.msra.mxu0 %v539
    %555 = vmatprep.subr.mxu0 0.0
    %556 = vmatpush1.msra.mxu0 %v538
    %557 = vmatprep.subr.mxu0 0.0
    %558 = vmatpush1.msra.mxu0 %v537
    %559 = vmatprep.subr.mxu0 0.0
    %560 = vmatpush1.msra.mxu0 %v536
    %561 = vmatprep.subr.mxu0 0.0
    %562 = vmatpush1.msra.mxu0 %v535
    %563 = vmatprep.subr.mxu0 0.0
    %564 = vmatpush1.msra.mxu0 %v534
    %565 = vmatprep.subr.mxu0 0.0
    %566 = vmatpush1.msra.mxu0 %v533
    %567 = vmatprep.subr.mxu0 0.0
    %568 = vmatpush1.msra.mxu0 %v532
    %569 = vmatprep.subr.mxu0 0.0
    %570 = vmatpush1.msra.mxu0 %v531
    %571 = vmatprep.subr.mxu0 0.0
    %572 = vmatpush1.msra.mxu0 %v530
    %573 = vmatprep.subr.mxu0 0.0
    %574 = vmatpush1.msra.mxu0 %v529
    %575 = vmatprep.subr.mxu0 0.0
    %576 = vmatpush1.msra.mxu0 %v528
    %577 = vmatprep.subr.mxu0 0.0
    %578 = vmatpush1.msra.mxu0 %v527
    %579 = vmatprep.subr.mxu0 0.0
    %580 = vmatpush2.msra.mxu0 0.0
    %581 = vmatprep.subr.mxu0 0.0
    %582 = vmatpush2.msra.mxu0 0.0
    %583 = vmatprep.subr.mxu0 0.0
    %584 = vmatpush2.msra.mxu0 0.0
    %585 = vmatprep.subr.mxu0 0.0
    %586 = vmatpush2.msra.mxu0 0.0
    %587 = vmatprep.subr.mxu0 0.0
    %588 = vmatpush2.msra.mxu0 0.0
    %589 = vmatprep.subr.mxu0 0.0
    %590 = vmatpush2.msra.mxu0 0.0
    %591 = vmatprep.subr.mxu0 0.0
    %592 = vmatpush2.msra.mxu0 0.0
    %593 = vmatprep.subr.mxu0 0.0
    %594 = vmatpush2.msra.mxu0 0.0
    %595 = vmatprep.subr.mxu0 0.0
    %596 = vmatpush2.msra.mxu0 0.0
    %597 = vmatprep.subr.mxu0 0.0
    %598 = vmatpush2.msra.mxu0 0.0
    %599 = vmatprep.subr.mxu0 0.0
    %600 = vmatpush2.msra.mxu0 0.0
    %601 = vmatprep.subr.mxu0 0.0
    %602 = vmatpush2.msra.mxu0 0.0
    %603 = vmatprep.subr.mxu0 0.0
    %604 = vmatpush2.msra.mxu0 0.0
    %605 = vmatprep.subr.mxu0 0.0
    %606 = vmatpush2.msra.mxu0 0.0
    %607 = vmatprep.subr.mxu0 0.0
    %608 = vmatpush2.msra.mxu0 0.0
    %609 = vmatprep.subr.mxu0 0.0
    %610 = vmatpush2.msra.mxu0 0.0
    %611 = vmatprep.mubr.f32.mxu0 0.0
    %612 = vmatmul.mubr.f32.gmra.mxu0 %v525
    %v613 = vpop.f32.mrf.mxu0
    %v614 = vadd.f32 %v546, %v613
    %v615 = vpop.f32.mrf.mxu0
    %616 = vdwg.mxu0
    %v617 = vmax.f32 %v614, 0.0
    %v618 = vrot.slane %v617, 4
    %v619 = vadd.f32 %v617, %v618
    %v620 = vrot.slane %v619, 2
    %v621 = vadd.f32 %v619, %v620
    %v622 = vrot.slane %v621, 1
    %v623 = vadd.f32 %v621, %v622
    %v624 = vmul.f32 %v623, 0.125
    %v625 = vsub.f32 %v617, %v624
    %v626 = vmul.f32 %v625, %v625
    %v627 = vrot.slane %v626, 4
    %v628 = vadd.f32 %v626, %v627
    %v629 = vrot.slane %v628, 2
    %v630 = vadd.f32 %v628, %v629
    %v631 = vrot.slane %v630, 1
    %v632 = vadd.f32 %v630, %v631
    %v633 = vmul.f32 %v632, 0.125
    %v634 = vadd.f32 %v633, 1e-05
    %v635 = vrsqrt.pop %v634
    %v636 = vmul.f32 %v55, %v635
    %v637 = vmul.f32 %v624, %v636
    %v639 = vrot.slane %v637, 7
    %v641 = vsub.f32 %v55, %v639
    %v642 = vlaneseq
    %v643 = vshrl.u32 %v642, 7
    %v644 = vsub.s32 3, %v643
    %v645 = vrot.slane %v636, %v644
    %v646 = vmul.f32 %v617, %v645
    %v647 = vlaneseq
    %v648 = vshrl.u32 %v647, 7
    %v649 = vsub.s32 4, %v648
    %v650 = vrot.slane %v641, %v649
    %v651 = vadd.f32 %v646, %v650
    %s652 = scalar_lea.vmem [#allocation5], 640
    %v653 = vld [vmem:[%s652] sm:$0xff]
    %v654 = vld [vmem:[%s652 + $0x8] sm:$0xff]
    %v655 = vld [vmem:[%s652 + $0x10] sm:$0xff]
    %v656 = vld [vmem:[%s652 + $0x18] sm:$0xff]
    %v657 = vld [vmem:[%s652 + $0x20] sm:$0xff]
    %v658 = vld [vmem:[%s652 + $0x28] sm:$0xff]
    %v659 = vld [vmem:[%s652 + $0x30] sm:$0xff]
    %v660 = vld [vmem:[%s652 + $0x38] sm:$0xff]
    %v661 = vld [vmem:[%s652 + $0x40] sm:$0xff]
    %v662 = vld [vmem:[%s652 + $0x48] sm:$0xff]
    %v663 = vld [vmem:[%s652 + $0x50] sm:$0xff]
    %v664 = vld [vmem:[%s652 + $0x58] sm:$0xff]
    %v665 = vld [vmem:[%s652 + $0x60] sm:$0xff]
    %v666 = vld [vmem:[%s652 + $0x68] sm:$0xff]
    %v667 = vld [vmem:[%s652 + $0x70] sm:$0xff]
    %v668 = vld [vmem:[%s652 + $0x78] sm:$0xff]
    %v669 = vlaneseq
    %v670 = vshrl.u32 %v669, 7
    %v671 = vsub.s32 5, %v670
    %v672 = vrot.slane %v55, %v671
    %673 = vmatprep.subr.mxu0 0.0
    %674 = vmatpush1.msra.mxu0 %v668
    %675 = vmatprep.subr.mxu0 0.0
    %676 = vmatpush1.msra.mxu0 %v667
    %677 = vmatprep.subr.mxu0 0.0
    %678 = vmatpush1.msra.mxu0 %v666
    %679 = vmatprep.subr.mxu0 0.0
    %680 = vmatpush1.msra.mxu0 %v665
    %681 = vmatprep.subr.mxu0 0.0
    %682 = vmatpush1.msra.mxu0 %v664
    %683 = vmatprep.subr.mxu0 0.0
    %684 = vmatpush1.msra.mxu0 %v663
    %685 = vmatprep.subr.mxu0 0.0
    %686 = vmatpush1.msra.mxu0 %v662
    %687 = vmatprep.subr.mxu0 0.0
    %688 = vmatpush1.msra.mxu0 %v661
    %689 = vmatprep.subr.mxu0 0.0
    %690 = vmatpush1.msra.mxu0 %v660
    %691 = vmatprep.subr.mxu0 0.0
    %692 = vmatpush1.msra.mxu0 %v659
    %693 = vmatprep.subr.mxu0 0.0
    %694 = vmatpush1.msra.mxu0 %v658
    %695 = vmatprep.subr.mxu0 0.0
    %696 = vmatpush1.msra.mxu0 %v657
    %697 = vmatprep.subr.mxu0 0.0
    %698 = vmatpush1.msra.mxu0 %v656
    %699 = vmatprep.subr.mxu0 0.0
    %700 = vmatpush1.msra.mxu0 %v655
    %701 = vmatprep.subr.mxu0 0.0
    %702 = vmatpush1.msra.mxu0 %v654
    %703 = vmatprep.subr.mxu0 0.0
    %704 = vmatpush1.msra.mxu0 %v653
    %705 = vmatprep.subr.mxu0 0.0
    %706 = vmatpush2.msra.mxu0 0.0
    %707 = vmatprep.subr.mxu0 0.0
    %708 = vmatpush2.msra.mxu0 0.0
    %709 = vmatprep.subr.mxu0 0.0
    %710 = vmatpush2.msra.mxu0 0.0
    %711 = vmatprep.subr.mxu0 0.0
    %712 = vmatpush2.msra.mxu0 0.0
    %713 = vmatprep.subr.mxu0 0.0
    %714 = vmatpush2.msra.mxu0 0.0
    %715 = vmatprep.subr.mxu0 0.0
    %716 = vmatpush2.msra.mxu0 0.0
    %717 = vmatprep.subr.mxu0 0.0
    %718 = vmatpush2.msra.mxu0 0.0
    %719 = vmatprep.subr.mxu0 0.0
    %720 = vmatpush2.msra.mxu0 0.0
    %721 = vmatprep.subr.mxu0 0.0
    %722 = vmatpush2.msra.mxu0 0.0
    %723 = vmatprep.subr.mxu0 0.0
    %724 = vmatpush2.msra.mxu0 0.0
    %725 = vmatprep.subr.mxu0 0.0
    %726 = vmatpush2.msra.mxu0 0.0
    %727 = vmatprep.subr.mxu0 0.0
    %728 = vmatpush2.msra.mxu0 0.0
    %729 = vmatprep.subr.mxu0 0.0
    %730 = vmatpush2.msra.mxu0 0.0
    %731 = vmatprep.subr.mxu0 0.0
    %732 = vmatpush2.msra.mxu0 0.0
    %733 = vmatprep.subr.mxu0 0.0
    %734 = vmatpush2.msra.mxu0 0.0
    %735 = vmatprep.subr.mxu0 0.0
    %736 = vmatpush2.msra.mxu0 0.0
    %737 = vmatprep.mubr.f32.mxu0 0.0
    %738 = vmatmul.mubr.f32.gmra.mxu0 %v651
    %v739 = vpop.f32.mrf.mxu0
    %v740 = vadd.f32 %v672, %v739
    %v741 = vpop.f32.mrf.mxu0
    %742 = vdwg.mxu0
    %743 = vst [vmem:[#allocation8] sm:$0xff] %v740
    // Predicated region
    $region26: #{tpu_custom_call.1} parent=1 // pred_check
      _
    $region27: #{tpu_custom_call.1} parent=1 // pred_check_branch
      %745 = sbr.rel (0) target = $region29
    $region28: #{tpu_custom_call.1} parent=1 // pred_region
      %s747 = ssub.s32 128, 128
      %748 = vsyncadd [#allocation4], %s747
      %s750 = sshll.u32 [#allocation8], 4
      %s751 = int_to_ptr.vmem [resolvable:$true] %s750
      %753 = dma.vmem_to_hbm [thread:$0]  %s751, 128, %s3, [#allocation4]
    $region29: #{tpu_custom_call.1} parent=1 // pred_fallthru
      _
    // Predicated region
    $region30: #{tpu_custom_call.1} parent=1 // pred_check
      _
    $region31: #{tpu_custom_call.1} parent=1 // pred_check_branch
      %755 = sbr.rel (0) target = $region33
    $region32: #{tpu_custom_call.1} parent=1 // pred_region
      %756 = dma.done [#allocation4], 128
    $region33: #{tpu_custom_call.1} parent=1 // pred_fallthru
      _
    %757 = vsyncpa [#allocation3], 1
    %758 = vsyncpa [#allocation6], 1
    %759 = vsyncpa [#allocation4], 1

</llo_original>
